<compile_context>
chip_gen: v6e
topology: v6e:2x2x1
jax: 0.10.0
libtpu: 0.0.40
codegen_flags: <defaults>
</compile_context>

<pallas_src>
from functools import partial

import jax
import jax.numpy as jnp
from jax.experimental import pallas as pl
from jax.experimental.pallas import tpu as pltpu


_NEG_INF = -1e30  # large finite negative: no -inf arithmetic, NaN-safe masking


# ----------------------------------------------------------------------------
# Flash-style kernel. Grid = (batch blocks, q tiles, kv tiles); kv is the
# reduction ("arbitrary") axis. Scratch (q, m, l, acc) persists across kv steps.
# ----------------------------------------------------------------------------
def _head_flash_kernel(xq_ref, xkv_ref, wqkv_ref, o_ref, q_s, m_s, l_s, acc_s):
    bb, tq, E = xq_ref.shape
    tk = xkv_ref.shape[1]
    H = o_ref.shape[2]

    qi = pl.program_id(1)
    ki = pl.program_id(2)
    nk = pl.num_programs(2)
    q_start = qi * tq
    k_start = ki * tk
    q_last = q_start + tq - 1

    wqkv = wqkv_ref[...]  # (E, 3H) bf16, VMEM-resident across the whole grid

    @pl.when(ki == 0)
    def _init():
        # Project Q once per (batch block, q tile); Wq already carries 1/sqrt(H).
        xq = xq_ref[...].reshape(bb * tq, E).astype(jnp.bfloat16)
        q = jnp.dot(xq, wqkv[:, :H], preferred_element_type=jnp.float32)
        q_s[...] = q.reshape(bb, tq, H).astype(jnp.bfloat16)
        m_s[...] = jnp.full_like(m_s, _NEG_INF)
        l_s[...] = jnp.zeros_like(l_s)
        acc_s[...] = jnp.zeros_like(acc_s)

    def _tile_update(apply_mask):
        # K/V projection of this KV tile (bf16 MXU operands, f32 accumulate).
        xkv = xkv_ref[...].reshape(bb * tk, E).astype(jnp.bfloat16)
        kv = jnp.dot(xkv, wqkv[:, H:], preferred_element_type=jnp.float32)  # (bb*tk, 2H)
        k = kv[:, :H].reshape(bb, tk, H).astype(jnp.bfloat16)
        v = kv[:, H:].reshape(bb, tk, H).astype(jnp.bfloat16)

        s = jnp.einsum("bqd,bkd->bqk", q_s[...], k,
                       preferred_element_type=jnp.float32)                  # (bb, tq, tk) f32
        if apply_mask:
            # Skinny iotas + broadcast compare: no (T,T) (or even (tq,tk)x2) iota buffers.
            rows = q_start + jax.lax.broadcasted_iota(jnp.int32, (tq, 1), 0)
            cols = k_start + jax.lax.broadcasted_iota(jnp.int32, (1, tk), 1)
            s = jnp.where((cols <= rows)[None, :, :], s, _NEG_INF)

        # Online softmax update, all f32 (VPU/EUP path).
        m_prev = m_s[...]
        m_new = jnp.maximum(m_prev, jnp.max(s, axis=-1, keepdims=True))
        alpha = jnp.exp(m_prev - m_new)
        p = jnp.exp(s - m_new)
        l_s[...] = alpha * l_s[...] + jnp.sum(p, axis=-1, keepdims=True)
        acc_s[...] = alpha * acc_s[...] + jnp.einsum(
            "bqk,bkd->bqd", p.astype(jnp.bfloat16), v,
            preferred_element_type=jnp.float32)
        m_s[...] = m_new

    fully_visible = k_start + tk - 1 <= q_start   # whole tile at/below the diagonal
    fully_masked = k_start > q_last               # whole tile above the diagonal -> skip

    @pl.when(fully_visible)
    def _():
        _tile_update(apply_mask=False)            # no mask cost on interior tiles

    @pl.when(jnp.logical_and(jnp.logical_not(fully_visible),
                             jnp.logical_not(fully_masked)))
    def _():
        _tile_update(apply_mask=True)             # diagonal-straddling tiles only

    @pl.when(ki == nk - 1)
    def _finalize():
        inv_l = pl.reciprocal(l_s[...], approx=True)
        o_ref[...] = (acc_s[...] * inv_l).astype(o_ref.dtype)
        # Head.dropout: identity in eval mode.


# ----------------------------------------------------------------------------
# Host-side weight prep: do the fold/concat/cast ONCE, outside the per-call path.
# ----------------------------------------------------------------------------
def prepare_wqkv(wq, wk, wv):
    """wq/wk/wv: (E, H) (nn.Linear.weight^T). Fold 1/sqrt(H) into Wq in f32,
    fuse into one lane-denser (E, 3H) matrix, cast to bf16."""
    H = wq.shape[1]
    scale = jnp.float32(H ** -0.5)
    wqkv = jnp.concatenate(
        [wq.astype(jnp.float32) * scale,
         wk.astype(jnp.float32),
         wv.astype(jnp.float32)],
        axis=-1)
    return wqkv.astype(jnp.bfloat16)


@partial(jax.jit, static_argnames=("block_q", "block_k", "block_b"))
def head_forward(x, wqkv, *, block_q=256, block_k=256, block_b=None):
    """x: (B, T, E); wqkv: (E, 3H) from prepare_wqkv(). Returns (B, T, H)."""
    B, T, E = x.shape
    H = wqkv.shape[1] // 3

    def pick_tile(target):
        # Second-to-last block dim must be a multiple of 8 or the full extent.
        if T <= target or T % 8 != 0:
            return T
        t = min(target, T)
        t -= t % 8
        while t > 8 and T % t != 0:
            t -= 8
        return t

    tq = pick_tile(block_q)
    tk = pick_tile(block_k)

    if block_b is None:
        # Fill the MXU M dim (bb*tq rows) but keep >= 2 steps on the parallel
        # grid axes so both v7x TensorCores get work; v5e/v6e are indifferent.
        bb = max(1, min(B // 2 if B >= 2 else B, max(1, 256 // tq)))
    else:
        bb = max(1, block_b)
    while B % bb != 0:
        bb -= 1

    grid = (B // bb, T // tq, T // tk)

    # Advisory cost hint for XLA's scheduler (projection + causal scores + p@v).
    cost = pl.CostEstimate(
        flops=2 * B * T * E * 3 * H + 2 * B * T * T * H,
        transcendentals=B * T * T // 2,
        bytes_accessed=(x.size * x.dtype.itemsize
                        + wqkv.size * wqkv.dtype.itemsize
                        + B * T * H * x.dtype.itemsize))

    return pl.pallas_call(
        _head_flash_kernel,
        out_shape=jax.ShapeDtypeStruct((B, T, H), x.dtype),
        grid_spec=pltpu.PrefetchScalarGridSpec(
            num_scalar_prefetch=0,
            grid=grid,
            in_specs=[
                pl.BlockSpec((bb, tq, E), lambda b, qi, ki: (b, qi, 0)),  # x for Q
                pl.BlockSpec((bb, tk, E), lambda b, qi, ki: (b, ki, 0)),  # x for K/V
                pl.BlockSpec((E, 3 * H), lambda b, qi, ki: (0, 0)),       # fused weights
            ],
            out_specs=pl.BlockSpec((bb, tq, H), lambda b, qi, ki: (b, qi, 0)),
            scratch_shapes=[
                pltpu.VMEM((bb, tq, H), jnp.bfloat16),   # q (bf16, MXU-ready)
                pltpu.VMEM((bb, tq, 1), jnp.float32),    # running max m
                pltpu.VMEM((bb, tq, 1), jnp.float32),    # running denom l
                pltpu.VMEM((bb, tq, H), jnp.float32),    # output accumulator
            ],
        ),
        compiler_params=pltpu.CompilerParams(
            dimension_semantics=("parallel", "parallel", "arbitrary")),
        cost_estimate=cost,
    )(x, x, wqkv)


# Pure-JAX reference (mirrors the PyTorch Head.forward, eval mode), f32.
def _reference(x, wq, wk, wv):
    T = x.shape[1]
    H = wq.shape[1]
    q = x @ wq
    k = x @ wk
    v = x @ wv
    s = (q @ jnp.swapaxes(k, -2, -1)) * (H ** (-0.5))
    mask = jnp.tril(jnp.ones((T, T), dtype=bool))
    s = jnp.where(mask, s, -jnp.inf)
    p = jax.nn.softmax(s, axis=-1)
    return p @ v


if __name__ == "__main__":
    # Small shapes consistent with the module.
    B, T = 2, 8            # batch, sequence (block_size == T)
    n_embs = 32
    head_size = 8

    key = jax.random.PRNGKey(0)
    kx, kq, kk, kv = jax.random.split(key, 4)

    x = jax.random.normal(kx, (B, T, n_embs), dtype=jnp.float32)
    # Per-projection weights stored as (E, H) (i.e. nn.Linear.weight^T, no bias).
    wq = 0.1 * jax.random.normal(kq, (n_embs, head_size), dtype=jnp.float32)
    wk = 0.1 * jax.random.normal(kk, (n_embs, head_size), dtype=jnp.float32)
    wv = 0.1 * jax.random.normal(kv, (n_embs, head_size), dtype=jnp.float32)

    wqkv = prepare_wqkv(wq, wk, wv)          # once, outside the per-call path
    out = head_forward(x, wqkv)
    out = jax.block_until_ready(out)

    ref = _reference(x, wq, wk, wv)
    assert out.shape == (B, T, head_size)
    # Tolerance covers the deliberate bf16 MXU operands + approx reciprocal.
    err = float(jnp.max(jnp.abs(out - ref)))
    assert jnp.allclose(out, ref, atol=5e-2, rtol=5e-2), f"mismatch vs reference (max abs err {err})"

    print("KERNEL_OK")
</pallas_src>

<mosaic_0001>
module attributes {stable_mosaic.version = 11 : i64} {
  func.func @_head_flash_kernel(%arg0: i32, %arg1: i32, %arg2: i32, %arg3: memref<1x8x32xf32, #tpu.memory_space<vmem>>, %arg4: memref<1x8x32xf32, #tpu.memory_space<vmem>>, %arg5: memref<32x24xbf16, #tpu.memory_space<vmem>>, %arg6: memref<1x8x8xf32, #tpu.memory_space<vmem>>, %arg7: memref<1x8x8xbf16, #tpu.memory_space<vmem>>, %arg8: memref<1x8x1xf32, #tpu.memory_space<vmem>>, %arg9: memref<1x8x1xf32, #tpu.memory_space<vmem>>, %arg10: memref<1x8x8xf32, #tpu.memory_space<vmem>>) attributes {dimension_semantics = [#tpu.dimension_semantics<parallel>, #tpu.dimension_semantics<parallel>, #tpu.dimension_semantics<arbitrary>], iteration_bounds = array<i64: 2, 1, 1>, scalar_prefetch = 0 : i64, scratch_operands = 4 : i64, tpu.core_type = #tpu.core_type<tc>, window_params = [{transform_indices = @transform_0, window_bounds = array<i64: 1, 8, 32>}, {transform_indices = @transform_1, window_bounds = array<i64: 1, 8, 32>}, {pipeline_mode = #tpu.pipeline_mode<synchronous>, transform_indices = @transform_2, window_bounds = array<i64: 32, 24>}, {transform_indices = @transform_3, window_bounds = array<i64: 1, 8, 8>}]} {
    %c8_i32 = arith.constant 8 : i32
    %0 = arith.muli %arg1, %c8_i32 : i32
    %c8_i32_0 = arith.constant 8 : i32
    %1 = arith.muli %arg2, %c8_i32_0 : i32
    %c8_i32_1 = arith.constant 8 : i32
    %2 = arith.addi %0, %c8_i32_1 : i32
    %c1_i32 = arith.constant 1 : i32
    %3 = arith.subi %2, %c1_i32 : i32
    %c0 = arith.constant 0 : index
    %c0_2 = arith.constant 0 : index
    %4 = vector.load %arg5[%c0, %c0_2] : memref<32x24xbf16, #tpu.memory_space<vmem>>, vector<32x24xbf16>
    %c0_i32 = arith.constant 0 : i32
    %5 = arith.cmpi eq, %arg2, %c0_i32 : i32
    %6 = arith.extui %5 : i1 to i32
    %c0_i32_3 = arith.constant 0 : i32
    %7 = arith.cmpi ne, %6, %c0_i32_3 : i32
    scf.if %7 {
      %c0_11 = arith.constant 0 : index
      %c0_12 = arith.constant 0 : index
      %c0_13 = arith.constant 0 : index
      %22 = vector.load %arg3[%c0_11, %c0_12, %c0_13] : memref<1x8x32xf32, #tpu.memory_space<vmem>>, vector<1x8x32xf32>
      %23 = vector.shape_cast %22 : vector<1x8x32xf32> to vector<8x32xf32>
      %24 = arith.truncf %23 : vector<8x32xf32> to vector<8x32xbf16>
      %25 = vector.extract_strided_slice %4 {offsets = [0, 0], sizes = [32, 8], strides = [1, 1]} : vector<32x24xbf16> to vector<32x8xbf16>
      %cst = arith.constant dense<0.000000e+00> : vector<8x8xf32>
      %26 = tpu.matmul %24, %25, %cst {dimension_numbers = #tpu.dot_dimension_numbers<[1], [0], [0], [1], [0, 0, 1, 1], [], []>} : vector<8x32xbf16>, vector<32x8xbf16>, vector<8x8xf32> -> vector<8x8xf32>
      %27 = vector.shape_cast %26 : vector<8x8xf32> to vector<1x8x8xf32>
      %28 = arith.truncf %27 : vector<1x8x8xf32> to vector<1x8x8xbf16>
      %c0_14 = arith.constant 0 : index
      %c0_15 = arith.constant 0 : index
      %c0_16 = arith.constant 0 : index
      %29 = vector.load %arg7[%c0_14, %c0_15, %c0_16] : memref<1x8x8xbf16, #tpu.memory_space<vmem>>, vector<1x8x8xbf16>
      tpu.vector_store %arg7[%c0_14, %c0_15, %c0_16], %28 {strides = array<i32>} : memref<1x8x8xbf16, #tpu.memory_space<vmem>>, vector<1x8x8xbf16>,
      %cst_17 = arith.constant -1.000000e+30 : f32
      %30 = vector.broadcast %cst_17 : f32 to vector<1x8x1xf32>
      %c0_18 = arith.constant 0 : index
      %c0_19 = arith.constant 0 : index
      %c0_20 = arith.constant 0 : index
      %31 = vector.load %arg8[%c0_18, %c0_19, %c0_20] : memref<1x8x1xf32, #tpu.memory_space<vmem>>, vector<1x8x1xf32>
      tpu.vector_store %arg8[%c0_18, %c0_19, %c0_20], %30 {strides = array<i32>} : memref<1x8x1xf32, #tpu.memory_space<vmem>>, vector<1x8x1xf32>,
      %cst_21 = arith.constant 0.000000e+00 : f32
      %32 = vector.broadcast %cst_21 : f32 to vector<1x8x1xf32>
      %c0_22 = arith.constant 0 : index
      %c0_23 = arith.constant 0 : index
      %c0_24 = arith.constant 0 : index
      %33 = vector.load %arg9[%c0_22, %c0_23, %c0_24] : memref<1x8x1xf32, #tpu.memory_space<vmem>>, vector<1x8x1xf32>
      tpu.vector_store %arg9[%c0_22, %c0_23, %c0_24], %32 {strides = array<i32>} : memref<1x8x1xf32, #tpu.memory_space<vmem>>, vector<1x8x1xf32>,
      %cst_25 = arith.constant 0.000000e+00 : f32
      %34 = vector.broadcast %cst_25 : f32 to vector<1x8x8xf32>
      %c0_26 = arith.constant 0 : index
      %c0_27 = arith.constant 0 : index
      %c0_28 = arith.constant 0 : index
      %35 = vector.load %arg10[%c0_26, %c0_27, %c0_28] : memref<1x8x8xf32, #tpu.memory_space<vmem>>, vector<1x8x8xf32>
      tpu.vector_store %arg10[%c0_26, %c0_27, %c0_28], %34 {strides = array<i32>} : memref<1x8x8xf32, #tpu.memory_space<vmem>>, vector<1x8x8xf32>,
    } else {
    }
    %c8_i32_4 = arith.constant 8 : i32
    %8 = arith.addi %1, %c8_i32_4 : i32
    %c1_i32_5 = arith.constant 1 : i32
    %9 = arith.subi %8, %c1_i32_5 : i32
    %10 = arith.cmpi sle, %9, %0 : i32
    %11 = arith.cmpi sgt, %1, %3 : i32
    %12 = arith.extui %10 : i1 to i32
    %c0_i32_6 = arith.constant 0 : i32
    %13 = arith.cmpi ne, %12, %c0_i32_6 : i32
    scf.if %13 {
      %c0_11 = arith.constant 0 : index
      %c0_12 = arith.constant 0 : index
      %c0_13 = arith.constant 0 : index
      %22 = vector.load %arg4[%c0_11, %c0_12, %c0_13] : memref<1x8x32xf32, #tpu.memory_space<vmem>>, vector<1x8x32xf32>
      %23 = vector.shape_cast %22 : vector<1x8x32xf32> to vector<8x32xf32>
      %24 = arith.truncf %23 : vector<8x32xf32> to vector<8x32xbf16>
      %25 = vector.extract_strided_slice %4 {offsets = [0, 8], sizes = [32, 16], strides = [1, 1]} : vector<32x24xbf16> to vector<32x16xbf16>
      %cst = arith.constant dense<0.000000e+00> : vector<8x16xf32>
      %26 = tpu.matmul %24, %25, %cst {dimension_numbers = #tpu.dot_dimension_numbers<[1], [0], [0], [1], [0, 0, 1, 1], [], []>} : vector<8x32xbf16>, vector<32x16xbf16>, vector<8x16xf32> -> vector<8x16xf32>
      %27 = vector.extract_strided_slice %26 {offsets = [0, 0], sizes = [8, 8], strides = [1, 1]} : vector<8x16xf32> to vector<8x8xf32>
      %28 = vector.shape_cast %27 : vector<8x8xf32> to vector<1x8x8xf32>
      %29 = arith.truncf %28 : vector<1x8x8xf32> to vector<1x8x8xbf16>
      %30 = vector.extract_strided_slice %26 {offsets = [0, 8], sizes = [8, 8], strides = [1, 1]} : vector<8x16xf32> to vector<8x8xf32>
      %31 = vector.shape_cast %30 : vector<8x8xf32> to vector<1x8x8xf32>
      %32 = arith.truncf %31 : vector<1x8x8xf32> to vector<1x8x8xbf16>
      %c0_14 = arith.constant 0 : index
      %c0_15 = arith.constant 0 : index
      %c0_16 = arith.constant 0 : index
      %33 = vector.load %arg7[%c0_14, %c0_15, %c0_16] : memref<1x8x8xbf16, #tpu.memory_space<vmem>>, vector<1x8x8xbf16>
      "tpu.trace_start"() <{level = 10 : i32, message = "bqd,bkd->bqk"}> : () -> ()
      %cst_17 = arith.constant dense<0.000000e+00> : vector<1x8x8xf32>
      %34 = tpu.matmul %33, %29, %cst_17 {dimension_numbers = #tpu.dot_dimension_numbers<[2], [2], [1], [1], [0, 0, 0, 1, 1, 1], [0], [0]>} : vector<1x8x8xbf16>, vector<1x8x8xbf16>, vector<1x8x8xf32> -> vector<1x8x8xf32>
      "tpu.trace_stop"() : () -> ()
      %c0_18 = arith.constant 0 : index
      %c0_19 = arith.constant 0 : index
      %c0_20 = arith.constant 0 : index
      %35 = vector.load %arg8[%c0_18, %c0_19, %c0_20] : memref<1x8x1xf32, #tpu.memory_space<vmem>>, vector<1x8x1xf32>
      %cst_21 = arith.constant dense<0xFF800000> : vector<1x8xf32>
      %36 = vector.multi_reduction <maximumf>, %34, %cst_21 [2] : vector<1x8x8xf32> to vector<1x8xf32>
      %37 = vector.shape_cast %36 : vector<1x8xf32> to vector<1x8x1xf32>
      %38 = arith.maximumf %35, %37 : vector<1x8x1xf32>
      %39 = arith.subf %35, %38 : vector<1x8x1xf32>
      %40 = math.exp %39 : vector<1x8x1xf32>
      %41 = vector.broadcast %38 : vector<1x8x1xf32> to vector<1x8x8xf32>
      %42 = arith.subf %34, %41 : vector<1x8x8xf32>
      %43 = math.exp %42 : vector<1x8x8xf32>
      %c0_22 = arith.constant 0 : index
      %c0_23 = arith.constant 0 : index
      %c0_24 = arith.constant 0 : index
      %44 = vector.load %arg9[%c0_22, %c0_23, %c0_24] : memref<1x8x1xf32, #tpu.memory_space<vmem>>, vector<1x8x1xf32>
      %45 = arith.mulf %40, %44 : vector<1x8x1xf32>
      %cst_25 = arith.constant dense<0.000000e+00> : vector<1x8xf32>
      %46 = vector.multi_reduction <add>, %43, %cst_25 [2] : vector<1x8x8xf32> to vector<1x8xf32>
      %47 = vector.shape_cast %46 : vector<1x8xf32> to vector<1x8x1xf32>
      %48 = arith.addf %45, %47 : vector<1x8x1xf32>
      %c0_26 = arith.constant 0 : index
      %c0_27 = arith.constant 0 : index
      %c0_28 = arith.constant 0 : index
      %49 = vector.load %arg9[%c0_26, %c0_27, %c0_28] : memref<1x8x1xf32, #tpu.memory_space<vmem>>, vector<1x8x1xf32>
      tpu.vector_store %arg9[%c0_26, %c0_27, %c0_28], %48 {strides = array<i32>} : memref<1x8x1xf32, #tpu.memory_space<vmem>>, vector<1x8x1xf32>,
      %c0_29 = arith.constant 0 : index
      %c0_30 = arith.constant 0 : index
      %c0_31 = arith.constant 0 : index
      %50 = vector.load %arg10[%c0_29, %c0_30, %c0_31] : memref<1x8x8xf32, #tpu.memory_space<vmem>>, vector<1x8x8xf32>
      %51 = vector.broadcast %40 : vector<1x8x1xf32> to vector<1x8x8xf32>
      %52 = arith.mulf %51, %50 : vector<1x8x8xf32>
      %53 = arith.truncf %43 : vector<1x8x8xf32> to vector<1x8x8xbf16>
      "tpu.trace_start"() <{level = 10 : i32, message = "bqk,bkd->bqd"}> : () -> ()
      %cst_32 = arith.constant dense<0.000000e+00> : vector<1x8x8xf32>
      %54 = tpu.matmul %53, %32, %cst_32 {dimension_numbers = #tpu.dot_dimension_numbers<[2], [1], [1], [2], [0, 0, 0, 1, 1, 2], [0], [0]>} : vector<1x8x8xbf16>, vector<1x8x8xbf16>, vector<1x8x8xf32> -> vector<1x8x8xf32>
      "tpu.trace_stop"() : () -> ()
      %55 = arith.addf %52, %54 : vector<1x8x8xf32>
      %c0_33 = arith.constant 0 : index
      %c0_34 = arith.constant 0 : index
      %c0_35 = arith.constant 0 : index
      %56 = vector.load %arg10[%c0_33, %c0_34, %c0_35] : memref<1x8x8xf32, #tpu.memory_space<vmem>>, vector<1x8x8xf32>
      tpu.vector_store %arg10[%c0_33, %c0_34, %c0_35], %55 {strides = array<i32>} : memref<1x8x8xf32, #tpu.memory_space<vmem>>, vector<1x8x8xf32>,
      %c0_36 = arith.constant 0 : index
      %c0_37 = arith.constant 0 : index
      %c0_38 = arith.constant 0 : index
      %57 = vector.load %arg8[%c0_36, %c0_37, %c0_38] : memref<1x8x1xf32, #tpu.memory_space<vmem>>, vector<1x8x1xf32>
      tpu.vector_store %arg8[%c0_36, %c0_37, %c0_38], %38 {strides = array<i32>} : memref<1x8x1xf32, #tpu.memory_space<vmem>>, vector<1x8x1xf32>,
    } else {
    }
    %true = arith.constant true
    %14 = arith.xori %10, %true : i1
    %true_7 = arith.constant true
    %15 = arith.xori %11, %true_7 : i1
    %16 = arith.andi %14, %15 : i1
    %17 = arith.extui %16 : i1 to i32
    %c0_i32_8 = arith.constant 0 : i32
    %18 = arith.cmpi ne, %17, %c0_i32_8 : i32
    scf.if %18 {
      %c0_11 = arith.constant 0 : index
      %c0_12 = arith.constant 0 : index
      %c0_13 = arith.constant 0 : index
      %22 = vector.load %arg4[%c0_11, %c0_12, %c0_13] : memref<1x8x32xf32, #tpu.memory_space<vmem>>, vector<1x8x32xf32>
      %23 = vector.shape_cast %22 : vector<1x8x32xf32> to vector<8x32xf32>
      %24 = arith.truncf %23 : vector<8x32xf32> to vector<8x32xbf16>
      %25 = vector.extract_strided_slice %4 {offsets = [0, 8], sizes = [32, 16], strides = [1, 1]} : vector<32x24xbf16> to vector<32x16xbf16>
      %cst = arith.constant dense<0.000000e+00> : vector<8x16xf32>
      %26 = tpu.matmul %24, %25, %cst {dimension_numbers = #tpu.dot_dimension_numbers<[1], [0], [0], [1], [0, 0, 1, 1], [], []>} : vector<8x32xbf16>, vector<32x16xbf16>, vector<8x16xf32> -> vector<8x16xf32>
      %27 = vector.extract_strided_slice %26 {offsets = [0, 0], sizes = [8, 8], strides = [1, 1]} : vector<8x16xf32> to vector<8x8xf32>
      %28 = vector.shape_cast %27 : vector<8x8xf32> to vector<1x8x8xf32>
      %29 = arith.truncf %28 : vector<1x8x8xf32> to vector<1x8x8xbf16>
      %30 = vector.extract_strided_slice %26 {offsets = [0, 8], sizes = [8, 8], strides = [1, 1]} : vector<8x16xf32> to vector<8x8xf32>
      %31 = vector.shape_cast %30 : vector<8x8xf32> to vector<1x8x8xf32>
      %32 = arith.truncf %31 : vector<1x8x8xf32> to vector<1x8x8xbf16>
      %c0_14 = arith.constant 0 : index
      %c0_15 = arith.constant 0 : index
      %c0_16 = arith.constant 0 : index
      %33 = vector.load %arg7[%c0_14, %c0_15, %c0_16] : memref<1x8x8xbf16, #tpu.memory_space<vmem>>, vector<1x8x8xbf16>
      "tpu.trace_start"() <{level = 10 : i32, message = "bqd,bkd->bqk"}> : () -> ()
      %cst_17 = arith.constant dense<0.000000e+00> : vector<1x8x8xf32>
      %34 = tpu.matmul %33, %29, %cst_17 {dimension_numbers = #tpu.dot_dimension_numbers<[2], [2], [1], [1], [0, 0, 0, 1, 1, 1], [0], [0]>} : vector<1x8x8xbf16>, vector<1x8x8xbf16>, vector<1x8x8xf32> -> vector<1x8x8xf32>
      "tpu.trace_stop"() : () -> ()
      %35 = tpu.iota {dimensions = array<i32: 0>} : vector<8x1xi32>
      %36 = vector.broadcast %0 : i32 to vector<8x1xi32>
      %37 = arith.addi %36, %35 : vector<8x1xi32>
      %38 = tpu.iota {dimensions = array<i32: 1>} : vector<1x8xi32>
      %39 = vector.broadcast %1 : i32 to vector<1x8xi32>
      %40 = arith.addi %39, %38 : vector<1x8xi32>
      %41 = vector.broadcast %40 : vector<1x8xi32> to vector<8x8xi32>
      %42 = vector.broadcast %37 : vector<8x1xi32> to vector<8x8xi32>
      %43 = arith.cmpi sle, %41, %42 : vector<8x8xi32>
      %44 = vector.shape_cast %43 : vector<8x8xi1> to vector<1x8x8xi1>
      %cst_18 = arith.constant -1.000000e+30 : f32
      %45 = vector.broadcast %cst_18 : f32 to vector<1x8x8xf32>
      %46 = arith.select %44, %34, %45 : vector<1x8x8xi1>, vector<1x8x8xf32>
      %c0_19 = arith.constant 0 : index
      %c0_20 = arith.constant 0 : index
      %c0_21 = arith.constant 0 : index
      %47 = vector.load %arg8[%c0_19, %c0_20, %c0_21] : memref<1x8x1xf32, #tpu.memory_space<vmem>>, vector<1x8x1xf32>
      %cst_22 = arith.constant dense<0xFF800000> : vector<1x8xf32>
      %48 = vector.multi_reduction <maximumf>, %46, %cst_22 [2] : vector<1x8x8xf32> to vector<1x8xf32>
      %49 = vector.shape_cast %48 : vector<1x8xf32> to vector<1x8x1xf32>
      %50 = arith.maximumf %47, %49 : vector<1x8x1xf32>
      %51 = arith.subf %47, %50 : vector<1x8x1xf32>
      %52 = math.exp %51 : vector<1x8x1xf32>
      %53 = vector.broadcast %50 : vector<1x8x1xf32> to vector<1x8x8xf32>
      %54 = arith.subf %46, %53 : vector<1x8x8xf32>
      %55 = math.exp %54 : vector<1x8x8xf32>
      %c0_23 = arith.constant 0 : index
      %c0_24 = arith.constant 0 : index
      %c0_25 = arith.constant 0 : index
      %56 = vector.load %arg9[%c0_23, %c0_24, %c0_25] : memref<1x8x1xf32, #tpu.memory_space<vmem>>, vector<1x8x1xf32>
      %57 = arith.mulf %52, %56 : vector<1x8x1xf32>
      %cst_26 = arith.constant dense<0.000000e+00> : vector<1x8xf32>
      %58 = vector.multi_reduction <add>, %55, %cst_26 [2] : vector<1x8x8xf32> to vector<1x8xf32>
      %59 = vector.shape_cast %58 : vector<1x8xf32> to vector<1x8x1xf32>
      %60 = arith.addf %57, %59 : vector<1x8x1xf32>
      %c0_27 = arith.constant 0 : index
      %c0_28 = arith.constant 0 : index
      %c0_29 = arith.constant 0 : index
      %61 = vector.load %arg9[%c0_27, %c0_28, %c0_29] : memref<1x8x1xf32, #tpu.memory_space<vmem>>, vector<1x8x1xf32>
      tpu.vector_store %arg9[%c0_27, %c0_28, %c0_29], %60 {strides = array<i32>} : memref<1x8x1xf32, #tpu.memory_space<vmem>>, vector<1x8x1xf32>,
      %c0_30 = arith.constant 0 : index
      %c0_31 = arith.constant 0 : index
      %c0_32 = arith.constant 0 : index
      %62 = vector.load %arg10[%c0_30, %c0_31, %c0_32] : memref<1x8x8xf32, #tpu.memory_space<vmem>>, vector<1x8x8xf32>
      %63 = vector.broadcast %52 : vector<1x8x1xf32> to vector<1x8x8xf32>
      %64 = arith.mulf %63, %62 : vector<1x8x8xf32>
      %65 = arith.truncf %55 : vector<1x8x8xf32> to vector<1x8x8xbf16>
      "tpu.trace_start"() <{level = 10 : i32, message = "bqk,bkd->bqd"}> : () -> ()
      %cst_33 = arith.constant dense<0.000000e+00> : vector<1x8x8xf32>
      %66 = tpu.matmul %65, %32, %cst_33 {dimension_numbers = #tpu.dot_dimension_numbers<[2], [1], [1], [2], [0, 0, 0, 1, 1, 2], [0], [0]>} : vector<1x8x8xbf16>, vector<1x8x8xbf16>, vector<1x8x8xf32> -> vector<1x8x8xf32>
      "tpu.trace_stop"() : () -> ()
      %67 = arith.addf %64, %66 : vector<1x8x8xf32>
      %c0_34 = arith.constant 0 : index
      %c0_35 = arith.constant 0 : index
      %c0_36 = arith.constant 0 : index
      %68 = vector.load %arg10[%c0_34, %c0_35, %c0_36] : memref<1x8x8xf32, #tpu.memory_space<vmem>>, vector<1x8x8xf32>
      tpu.vector_store %arg10[%c0_34, %c0_35, %c0_36], %67 {strides = array<i32>} : memref<1x8x8xf32, #tpu.memory_space<vmem>>, vector<1x8x8xf32>,
      %c0_37 = arith.constant 0 : index
      %c0_38 = arith.constant 0 : index
      %c0_39 = arith.constant 0 : index
      %69 = vector.load %arg8[%c0_37, %c0_38, %c0_39] : memref<1x8x1xf32, #tpu.memory_space<vmem>>, vector<1x8x1xf32>
      tpu.vector_store %arg8[%c0_37, %c0_38, %c0_39], %50 {strides = array<i32>} : memref<1x8x1xf32, #tpu.memory_space<vmem>>, vector<1x8x1xf32>,
    } else {
    }
    %c0_i32_9 = arith.constant 0 : i32
    %19 = arith.cmpi eq, %arg2, %c0_i32_9 : i32
    %20 = arith.extui %19 : i1 to i32
    %c0_i32_10 = arith.constant 0 : i32
    %21 = arith.cmpi ne, %20, %c0_i32_10 : i32
    scf.if %21 {
      %c0_11 = arith.constant 0 : index
      %c0_12 = arith.constant 0 : index
      %c0_13 = arith.constant 0 : index
      %22 = vector.load %arg9[%c0_11, %c0_12, %c0_13] : memref<1x8x1xf32, #tpu.memory_space<vmem>>, vector<1x8x1xf32>
      %23 = tpu.reciprocal %22 {approx = true} : vector<1x8x1xf32> -> vector<1x8x1xf32>
      %c0_14 = arith.constant 0 : index
      %c0_15 = arith.constant 0 : index
      %c0_16 = arith.constant 0 : index
      %24 = vector.load %arg10[%c0_14, %c0_15, %c0_16] : memref<1x8x8xf32, #tpu.memory_space<vmem>>, vector<1x8x8xf32>
      %25 = vector.broadcast %23 : vector<1x8x1xf32> to vector<1x8x8xf32>
      %26 = arith.mulf %24, %25 : vector<1x8x8xf32>
      %c0_17 = arith.constant 0 : index
      %c0_18 = arith.constant 0 : index
      %c0_19 = arith.constant 0 : index
      %27 = vector.load %arg6[%c0_17, %c0_18, %c0_19] : memref<1x8x8xf32, #tpu.memory_space<vmem>>, vector<1x8x8xf32>
      tpu.vector_store %arg6[%c0_17, %c0_18, %c0_19], %26 {strides = array<i32>} : memref<1x8x8xf32, #tpu.memory_space<vmem>>, vector<1x8x8xf32>,
    } else {
    }
    return
  }
  func.func @transform_0(%arg0: i32, %arg1: i32, %arg2: i32) -> (i32, i32, i32) {
    %c0_i32 = arith.constant 0 : i32
    %c0_i32_0 = arith.constant 0 : i32
    return %arg0, %arg1, %c0_i32 : i32, i32, i32
  }
  func.func @transform_1(%arg0: i32, %arg1: i32, %arg2: i32) -> (i32, i32, i32) {
    %c0_i32 = arith.constant 0 : i32
    %c0_i32_0 = arith.constant 0 : i32
    return %arg0, %arg2, %c0_i32 : i32, i32, i32
  }
  func.func @transform_2(%arg0: i32, %arg1: i32, %arg2: i32) -> (i32, i32) {
    %c0_i32 = arith.constant 0 : i32
    %c0_i32_0 = arith.constant 0 : i32
    %c0_i32_1 = arith.constant 0 : i32
    return %c0_i32, %c0_i32_0 : i32, i32
  }
  func.func @transform_3(%arg0: i32, %arg1: i32, %arg2: i32) -> (i32, i32, i32) {
    %c0_i32 = arith.constant 0 : i32
    %c0_i32_0 = arith.constant 0 : i32
    return %arg0, %arg1, %c0_i32 : i32, i32, i32
  }
}

</mosaic_0001>

<llo_original>
// kernel: head_forward.1
$region0: #{head_forward.1}
  #allocation0 [shape = 'u32[]', space=smem, size = 0x4, offset = 0x4, fixed_abs, tag = 'smem constant byte address 0x4 - core index']
  #allocation1 [shape = 'u32[144,128]{1,0:T(1,128)}', space=vmem, size = 0x12000, scoped, tag = 'internal scratch']
  #allocation2 [shape = 'bf16[1,8,8]{2,1,0:T(8,128)(2,1)}', space=vmem, size = 0x800, scoped, tag = 'scratch operand']
  #allocation3 [shape = 'f32[1,8,1]{2,1,0:T(8,128)}', space=vmem, size = 0x1000, scoped, tag = 'scratch operand']
  #allocation4 [shape = 'f32[1,8,1]{2,1,0:T(8,128)}', space=vmem, size = 0x1000, scoped, tag = 'scratch operand']
  #allocation5 [shape = 'f32[1,8,8]{2,1,0:T(8,128)}', space=vmem, size = 0x1000, scoped, tag = 'scratch operand']
  %s0 = inlined_call_operand.vmem [shape: f32[2,8,32], index: 0, kind: input, shape index: {}, may-alias: {0,1}]
  %s1 = inlined_call_operand.vmem [shape: f32[2,8,32], index: 1, kind: input, shape index: {}, may-alias: {0,1}]
  %s2 = inlined_call_operand.vmem [shape: bf16[32,24], index: 2, kind: input, shape index: {}]
  %s3 = inlined_call_operand.hbm [shape: f32[2,8,8], index: 3, kind: output, shape index: {}]
  %s4 = sld [smem:[#allocation0]]
  $region61: #{head_forward.1} parent=0
    _
  %s6 = ssub.s32 1, %s4
  %s7 = scalar_select 0, %s6, %s4
  $region1: #{head_forward.1} parent=0
    #allocation6 [shape = 'u8[8192]{0}', space=vmem, size = 0x2000, scoped, tag = 'output window, operand 0']
    #allocation7 [shape = 's32[2]{0}', space=sflag, size = 0x8, scoped, tag = 'scoped memory for head_forward.1']
    %8 = vsyncpa [#allocation7], 0
    %s9 = scalar_lea.sflag [#allocation7], 1
    %10 = vsyncpa %s9, 0
    loop: start=0, step=1, limit=4
    $region2: #{head_forward.1} parent=1 // loop_pre_header
      _
    $region3: #{head_forward.1} parent=1 // loop_header
      %s12 = sphi 0, %s16
      %p13 = scmp.ge.s32.totalorder %s12, 4
      %s19 = sphi 0, %s38
      %s20 = sphi 0, %s34
      %s21 = sphi 0, %s30
      %s22 = sphi 0, %s19
      %s23 = sphi 0, %s20
      %s24 = sphi 0, %s21
      %s25 = sphi 0, %s22
      %s26 = sphi 0, %s23
      %s27 = sphi 0, %s24
      %s43 = sphi 0, %s45
      %s46 = sphi 0, %s43
      %s47 = sphi 0, %s46
      %s63 = sphi 0, %s47
      %s71 = sphi 0, %s73
      %s74 = sphi 0, %s71
      %s75 = sphi 0, %s74
      %s91 = sphi 0, %s75
      %s95 = sphi 0, %s95
      %s97 = sphi 0, %s95
      %s98 = sphi 0, %s97
      %s112 = sphi 0, %s98
      %s120 = sphi 0, %s122
      %s123 = sphi 0, %s120
      %s124 = sphi 0, %s123
      %s140 = sphi 0, %s124
    $region4: #{head_forward.1} parent=1 // loop_header_branch
      %15 = sbr.rel (%p13) target = $region8
    $region5: #{head_forward.1} parent=1 // loop_body
      %s17 = ssub.s32 %s12, 1
      %s18 = ssub.s32 %s12, 2
      %s28 = sadd.s32 1, %s21
      %p29 = scmp.ge.s32.totalorder %s28, 1
      %s30 = scalar_select %p29, 0, %s28
      %s31 = sadd.s32 1, %s20
      %s32 = scalar_select %p29, %s31, %s20
      %p33 = scmp.ge.s32.totalorder %s32, 1
      %s34 = scalar_select %p33, 0, %s32
      %s35 = sadd.s32 1, %s19
      %s36 = scalar_select %p33, %s35, %s19
      %p37 = scmp.ge.s32.totalorder %s36, 2
      %s38 = scalar_select %p37, 0, %s36
      %s39 = ssub.s32 %s19, %s38
      %s40 = ssub.s32 %s20, %s34
      %s41 = sor.u32 %s39, %s40
      %p42 = scmp.eq.s32.totalorder %s41, 0
      %s44 = sadd.s32 %s43, 1
      %s45 = scalar_select %p42, %s43, %s44
      %p48 = pneg %p42
      %p49 = scmp.eq.s32.totalorder %s12, 1
      %p50 = por %p48, %p49
      %p51 = scmp.ne.s32.totalorder %s43, %s46
      %p52 = scmp.eq.s32.totalorder %s12, 0
      %p53 = por %p51, %p52
      %p54 = scmp.ne.s32.totalorder %s43, %s46
      %p55 = scmp.eq.s32.totalorder %s17, 1
      %p56 = por %p54, %p55
      %p57 = scmp.ne.s32.totalorder %s46, %s47
      %p58 = scmp.eq.s32.totalorder %s17, 0
      %p59 = por %p57, %p58
      %p60 = scmp.ne.s32.totalorder %s46, %s47
      %p61 = scmp.eq.s32.totalorder %s18, 1
      %p62 = por %p60, %p61
      %p64 = scmp.ne.s32.totalorder %s47, %s63
      %p65 = scmp.eq.s32.totalorder %s18, 0
      %p66 = por %p64, %p65
      %s67 = ssub.s32 %s19, %s38
      %s68 = ssub.s32 %s21, %s30
      %s69 = sor.u32 %s67, %s68
      %p70 = scmp.eq.s32.totalorder %s69, 0
      %s72 = sadd.s32 %s71, 1
      %s73 = scalar_select %p70, %s71, %s72
      %p76 = pneg %p70
      %p77 = scmp.eq.s32.totalorder %s12, 1
      %p78 = por %p76, %p77
      %p79 = scmp.ne.s32.totalorder %s71, %s74
      %p80 = scmp.eq.s32.totalorder %s12, 0
      %p81 = por %p79, %p80
      %p82 = scmp.ne.s32.totalorder %s71, %s74
      %p83 = scmp.eq.s32.totalorder %s17, 1
      %p84 = por %p82, %p83
      %p85 = scmp.ne.s32.totalorder %s74, %s75
      %p86 = scmp.eq.s32.totalorder %s17, 0
      %p87 = por %p85, %p86
      %p88 = scmp.ne.s32.totalorder %s74, %s75
      %p89 = scmp.eq.s32.totalorder %s18, 1
      %p90 = por %p88, %p89
      %p92 = scmp.ne.s32.totalorder %s75, %s91
      %p93 = scmp.eq.s32.totalorder %s18, 0
      %p94 = por %p92, %p93
      %s96 = sadd.s32 %s95, 1
      %p99 = scmp.eq.s32.totalorder %s12, 1
      %p100 = scmp.ne.s32.totalorder %s95, %s97
      %p101 = scmp.eq.s32.totalorder %s12, 0
      %p102 = por %p100, %p101
      %p103 = scmp.ne.s32.totalorder %s95, %s97
      %p104 = scmp.eq.s32.totalorder %s17, 1
      %p105 = por %p103, %p104
      %p106 = scmp.ne.s32.totalorder %s97, %s98
      %p107 = scmp.eq.s32.totalorder %s17, 0
      %p108 = por %p106, %p107
      %p109 = scmp.ne.s32.totalorder %s97, %s98
      %p110 = scmp.eq.s32.totalorder %s18, 1
      %p111 = por %p109, %p110
      %p113 = scmp.ne.s32.totalorder %s98, %s112
      %p114 = scmp.eq.s32.totalorder %s18, 0
      %p115 = por %p113, %p114
      %s116 = ssub.s32 %s19, %s38
      %s117 = ssub.s32 %s20, %s34
      %s118 = sor.u32 %s116, %s117
      %p119 = scmp.eq.s32.totalorder %s118, 0
      %s121 = sadd.s32 %s120, 1
      %s122 = scalar_select %p119, %s120, %s121
      %p125 = pneg %p119
      %p126 = scmp.eq.s32.totalorder %s12, 1
      %p127 = por %p125, %p126
      %p128 = scmp.ne.s32.totalorder %s120, %s123
      %p129 = scmp.eq.s32.totalorder %s12, 0
      %p130 = por %p128, %p129
      %p131 = scmp.ne.s32.totalorder %s120, %s123
      %p132 = scmp.eq.s32.totalorder %s17, 1
      %p133 = por %p131, %p132
      %p134 = scmp.ne.s32.totalorder %s123, %s124
      %p135 = scmp.eq.s32.totalorder %s17, 0
      %p136 = por %p134, %p135
      %p137 = scmp.ne.s32.totalorder %s123, %s124
      %p138 = scmp.eq.s32.totalorder %s18, 1
      %p139 = por %p137, %p138
      %p141 = scmp.ne.s32.totalorder %s124, %s140
      %p142 = scmp.eq.s32.totalorder %s18, 0
      %p143 = por %p141, %p142
      %p144 = scmp.le.s32.totalorder 1, %s12
      %p145 = scmp.lt.s32.totalorder %s12, 3
      %p146 = pnand %p144, %p145
      %p147 = pneg %p146
      // Predicated region
      $region9: #{head_forward.1} parent=5 // pred_check
        _
      $region10: #{head_forward.1} parent=5 // pred_check_branch
        %149 = sbr.rel (%p146) target = $region12
      $region11: #{head_forward.1} parent=5 // pred_region
        %s150 = ssub.s32 %s12, 1
        // Predicated region
        $region13: #{head_forward.1} parent=11 // pred_check
          %p151 = pneg %p108
        $region14: #{head_forward.1} parent=11 // pred_check_branch
          %153 = sbr.rel (%p151) target = $region16
        $region15: #{head_forward.1} parent=11 // pred_region
          _
        $region16: #{head_forward.1} parent=11 // pred_fallthru
          _
      $region12: #{head_forward.1} parent=5 // pred_fallthru
        _
      %p154 = scmp.lt.s32.totalorder %s12, 2
      // Predicated region
      $region17: #{head_forward.1} parent=5 // pred_check
        %p155 = pneg %p154
      $region18: #{head_forward.1} parent=5 // pred_check_branch
        %157 = sbr.rel (%p155) target = $region20
      $region19: #{head_forward.1} parent=5 // pred_region
        // Predicated region
        $region21: #{head_forward.1} parent=19 // pred_check
          %p158 = pneg %p53
        $region22: #{head_forward.1} parent=19 // pred_check_branch
          %160 = sbr.rel (%p158) target = $region24
        $region23: #{head_forward.1} parent=19 // pred_region
          %p161 = scmp.lt.s32.totalorder %s19, 1
          %s162 = scalar_select %p161, %s19, 1
          %p163 = scmp.lt.s32.totalorder %s20, 0
          %s164 = scalar_select %p163, %s20, 0
          %s165 = sadd.s32 %s164, %s162
          %s166 = smul.addr %s165, 8
          %s167 = scalar_lea.vmem %s0, %s166
        $region24: #{head_forward.1} parent=19 // pred_fallthru
          _
        // Predicated region
        $region25: #{head_forward.1} parent=19 // pred_check
          %p168 = pneg %p81
        $region26: #{head_forward.1} parent=19 // pred_check_branch
          %170 = sbr.rel (%p168) target = $region28
        $region27: #{head_forward.1} parent=19 // pred_region
          %p171 = scmp.lt.s32.totalorder %s19, 1
          %s172 = scalar_select %p171, %s19, 1
          %p173 = scmp.lt.s32.totalorder %s21, 0
          %s174 = scalar_select %p173, %s21, 0
          %s175 = sadd.s32 %s174, %s172
          %s176 = smul.addr %s175, 8
          %s177 = scalar_lea.vmem %s1, %s176
        $region28: #{head_forward.1} parent=19 // pred_fallthru
          _
      $region20: #{head_forward.1} parent=5 // pred_fallthru
        _
      %p178 = scmp.le.s32.totalorder 1, %s12
      %p179 = scmp.lt.s32.totalorder %s12, 3
      %p180 = pnand %p178, %p179
      %p181 = pneg %p180
      // Predicated region
      $region29: #{head_forward.1} parent=5 // pred_check
        _
      $region30: #{head_forward.1} parent=5 // pred_check_branch
        %183 = sbr.rel (%p180) target = $region32
      $region31: #{head_forward.1} parent=5 // pred_region
        %s184 = ssub.s32 %s12, 1
        %p185 = scmp.lt.s32.totalorder %s22, 1
        %s186 = scalar_select %p185, %s22, 1
        %p187 = scmp.lt.s32.totalorder %s23, 0
        %s188 = scalar_select %p187, %s23, 0
        %s189 = sadd.s32 %s188, %s186
        %s190 = smul.addr %s189, 8
        %s191 = scalar_lea.vmem %s0, %s190
        %p192 = pneg %p59
        %p193 = pneg %p56
        %p194 = scmp.lt.s32.totalorder %s22, 1
        %s195 = scalar_select %p194, %s22, 1
        %p196 = scmp.lt.s32.totalorder %s24, 0
        %s197 = scalar_select %p196, %s24, 0
        %s198 = sadd.s32 %s197, %s195
        %s199 = smul.addr %s198, 8
        %s200 = scalar_lea.vmem %s1, %s199
        %p201 = pneg %p87
        %p202 = pneg %p84
        %p203 = pneg %p108
        %p204 = pneg %p105
        %p205 = pneg %p136
        %p206 = pneg %p133
        %s207 = sand.u32 %s123, 1
        %s208 = scalar_lea.sflag [#allocation7], %s207
        %s209 = sand.u32 %s123, 1
        %s210 = smul.addr %s209, 8
        %s211 = scalar_lea.vmem [#allocation6], %s210
        %p212 = scmp.lt.s32.totalorder %s22, 1
        %s213 = scalar_select %p212, %s22, 1
        %p214 = scmp.lt.s32.totalorder %s23, 0
        %s215 = scalar_select %p214, %s23, 0
        %s216 = sadd.s32 %s215, %s213
        %s217 = smul.addr %s216, 8
        %s218 = scalar_lea.vmem %s0, %s217
        %p219 = scmp.lt.s32.totalorder %s22, 1
        %s220 = scalar_select %p219, %s22, 1
        %p221 = scmp.lt.s32.totalorder %s24, 0
        %s222 = scalar_select %p221, %s24, 0
        %s223 = sadd.s32 %s222, %s220
        %s224 = smul.addr %s223, 8
        %s225 = scalar_lea.vmem %s1, %s224
        %s227 = smul.u32 %s23, 8
        %s228 = smul.u32 %s24, 8
        %s229 = sadd.s32 %s227, 7
        %v230 = vld [vmem:[%s2] sm:$0xf]
        %v231 = vld [vmem:[%s2 + $0x4] sm:$0xf]
        %v232 = vld [vmem:[%s2 + $0x8] sm:$0xf]
        %v233 = vld [vmem:[%s2 + $0xc] sm:$0xf]
        %p234 = scmp.eq.s32.totalorder %s24, 0
        // Predicated region
        $region33: #{head_forward.1} parent=31 // pred_check
          %p235 = pneg %p234
        $region34: #{head_forward.1} parent=31 // pred_check_branch
          %237 = sbr.rel (%p235) target = $region36
        $region35: #{head_forward.1} parent=31 // pred_region
          %v238 = vld [vmem:[%s218] sm:$0xff]
          %v239 = vpack.c.bf16 %v238, %v238
          %v244 = vunpack.c.l.b16 %v230
          %v245 = vunpack.c.l.b16 %v231
          %v246 = vunpack.c.l.b16 %v232
          %v247 = vunpack.c.l.b16 %v233
          %v248 = vpack.c.b16 %v245, %v244
          %v249 = vpack.c.b16 %v247, %v246
          %vm252 = vcmask 261120
          %v254 = vsel %vm252, %v239, 0
          %256 = vmatprep.subr.bf16.mxu0 0
          %257 = vmatpush1.bf16.msra.mxu0 0
          %258 = vmatprep.subr.bf16.mxu0 0
          %259 = vmatpush1.bf16.msra.mxu0 0
          %260 = vmatprep.subr.bf16.mxu0 0
          %261 = vmatpush1.bf16.msra.mxu0 0
          %262 = vmatprep.subr.bf16.mxu0 0
          %263 = vmatpush1.bf16.msra.mxu0 0
          %264 = vmatprep.subr.bf16.mxu0 0
          %265 = vmatpush1.bf16.msra.mxu0 0
          %266 = vmatprep.subr.bf16.mxu0 0
          %267 = vmatpush1.bf16.msra.mxu0 0
          %268 = vmatprep.subr.bf16.mxu0 0
          %269 = vmatpush1.bf16.msra.mxu0 %v249
          %270 = vmatprep.subr.bf16.mxu0 0
          %271 = vmatpush1.bf16.msra.mxu0 %v248
          %272 = vmatprep.subr.bf16.mxu0 0
          %273 = vmatpush2.bf16.msra.mxu0 0
          %274 = vmatprep.subr.bf16.mxu0 0
          %275 = vmatpush2.bf16.msra.mxu0 0
          %276 = vmatprep.subr.bf16.mxu0 0
          %277 = vmatpush2.bf16.msra.mxu0 0
          %278 = vmatprep.subr.bf16.mxu0 0
          %279 = vmatpush2.bf16.msra.mxu0 0
          %280 = vmatprep.subr.bf16.mxu0 0
          %281 = vmatpush2.bf16.msra.mxu0 0
          %282 = vmatprep.subr.bf16.mxu0 0
          %283 = vmatpush2.bf16.msra.mxu0 0
          %284 = vmatprep.subr.bf16.mxu0 0
          %285 = vmatpush2.bf16.msra.mxu0 0
          %286 = vmatprep.subr.bf16.mxu0 0
          %287 = vmatpush2.bf16.msra.mxu0 0
          %288 = vmatprep.mubr.bf16.mxu0 0
          %289 = vmatmul.mubr.bf16.gmra.mxu0 %v254
          %v290 = vpop.f32.mrf.mxu0
          %v291 = vadd.f32 0.0, %v290
          %v292 = vpop.f32.mrf.mxu0
          %v293 = vpop.f32.mrf.mxu0
          %v294 = vpop.f32.mrf.mxu0
          %295 = vdwg.mxu0
          %v296 = vpack.c.bf16 %v291, %v291
          %vm297 = vcmask 60416
          %298 = vst.msk [vmem:[#allocation2] sm:$0xf] %vm297, %v296
          %vm299 = vcmask 7168
          %300 = vst.msk [vmem:[#allocation3] sm:$0xff] %vm299, -1e+30
          %301 = vst.msk [vmem:[#allocation4] sm:$0xff] %vm299, 0.0
          %vm302 = vcmask 64512
          %303 = vst.msk [vmem:[#allocation5] sm:$0xff] %vm302, 0.0
        $region36: #{head_forward.1} parent=31 // pred_fallthru
          _
        %s304 = sadd.s32 %s228, 7
        %p305 = scmp.le.s32.totalorder %s304, %s227
        // Predicated region
        $region37: #{head_forward.1} parent=31 // pred_check
          %p306 = pneg %p305
        $region38: #{head_forward.1} parent=31 // pred_check_branch
          %308 = sbr.rel (%p306) target = $region40
        $region39: #{head_forward.1} parent=31 // pred_region
          %v309 = vld [vmem:[%s225] sm:$0xff]
          %v310 = vpack.c.bf16 %v309, %v309
          %v315 = vunpack.c.l.b16 %v230
          %v316 = vunpack.c.l.b16 %v231
          %v317 = vunpack.c.l.b16 %v232
          %v318 = vunpack.c.l.b16 %v233
          %v319 = vpack.c.b16 %v316, %v315
          %v320 = vpack.c.b16 %v318, %v317
          %321 = vrot.lane.b32.xlu0 %v319, 120
          %v322 = vpop.permute.xlu0 %321
          %323 = vrot.lane.b32.xlu0 %v320, 120
          %v324 = vpop.permute.xlu0 %323
          %vm327 = vcmask 261120
          %v329 = vsel %vm327, %v310, 0
          %331 = vmatprep.subr.bf16.mxu0 0
          %332 = vmatpush1.bf16.msra.mxu0 0
          %333 = vmatprep.subr.bf16.mxu0 0
          %334 = vmatpush1.bf16.msra.mxu0 0
          %335 = vmatprep.subr.bf16.mxu0 0
          %336 = vmatpush1.bf16.msra.mxu0 0
          %337 = vmatprep.subr.bf16.mxu0 0
          %338 = vmatpush1.bf16.msra.mxu0 0
          %339 = vmatprep.subr.bf16.mxu0 0
          %340 = vmatpush1.bf16.msra.mxu0 0
          %341 = vmatprep.subr.bf16.mxu0 0
          %342 = vmatpush1.bf16.msra.mxu0 0
          %343 = vmatprep.subr.bf16.mxu0 0
          %344 = vmatpush1.bf16.msra.mxu0 %v324
          %345 = vmatprep.subr.bf16.mxu0 0
          %346 = vmatpush1.bf16.msra.mxu0 %v322
          %347 = vmatprep.subr.bf16.mxu0 0
          %348 = vmatpush2.bf16.msra.mxu0 0
          %349 = vmatprep.subr.bf16.mxu0 0
          %350 = vmatpush2.bf16.msra.mxu0 0
          %351 = vmatprep.subr.bf16.mxu0 0
          %352 = vmatpush2.bf16.msra.mxu0 0
          %353 = vmatprep.subr.bf16.mxu0 0
          %354 = vmatpush2.bf16.msra.mxu0 0
          %355 = vmatprep.subr.bf16.mxu0 0
          %356 = vmatpush2.bf16.msra.mxu0 0
          %357 = vmatprep.subr.bf16.mxu0 0
          %358 = vmatpush2.bf16.msra.mxu0 0
          %359 = vmatprep.subr.bf16.mxu0 0
          %360 = vmatpush2.bf16.msra.mxu0 0
          %361 = vmatprep.subr.bf16.mxu0 0
          %362 = vmatpush2.bf16.msra.mxu0 0
          %363 = vmatprep.mubr.bf16.mxu0 0
          %364 = vmatmul.mubr.bf16.gmra.mxu0 %v329
          %v365 = vpop.f32.mrf.mxu0
          %v366 = vadd.f32 0.0, %v365
          %v367 = vpop.f32.mrf.mxu0
          %v368 = vpop.f32.mrf.mxu0
          %v369 = vpop.f32.mrf.mxu0
          %370 = vdwg.mxu0
          %v371 = vpack.c.bf16 %v366, %v366
          %v372 = vld [vmem:[#allocation2] sm:$0xf]
          %vm373 = vcmask 64512
          %v375 = vsel %vm373, %v372, 0
          %v378 = vsel %vm373, %v371, 0
          %380 = vmatprep.subr.bf16.mxu0 0
          %381 = vmatpush1.bf16.xpose.msra.mxu0 0
          %382 = vmatprep.subr.bf16.mxu0 0
          %383 = vmatpush1.bf16.xpose.msra.mxu0 0
          %384 = vmatprep.subr.bf16.mxu0 0
          %385 = vmatpush1.bf16.xpose.msra.mxu0 0
          %386 = vmatprep.subr.bf16.mxu0 0
          %387 = vmatpush1.bf16.xpose.msra.mxu0 0
          %388 = vmatprep.subr.bf16.mxu0 0
          %389 = vmatpush1.bf16.xpose.msra.mxu0 0
          %390 = vmatprep.subr.bf16.mxu0 0
          %391 = vmatpush1.bf16.xpose.msra.mxu0 0
          %392 = vmatprep.subr.bf16.mxu0 0
          %393 = vmatpush1.bf16.xpose.msra.mxu0 0
          %394 = vmatprep.subr.bf16.mxu0 0
          %395 = vmatpush1.bf16.xpose.msra.mxu0 %v378
          %396 = vmatprep.subr.bf16.mxu0 0
          %397 = vmatpush2.bf16.xpose.msra.mxu0 0
          %398 = vmatprep.subr.bf16.mxu0 0
          %399 = vmatpush2.bf16.xpose.msra.mxu0 0
          %400 = vmatprep.subr.bf16.mxu0 0
          %401 = vmatpush2.bf16.xpose.msra.mxu0 0
          %402 = vmatprep.subr.bf16.mxu0 0
          %403 = vmatpush2.bf16.xpose.msra.mxu0 0
          %404 = vmatprep.subr.bf16.mxu0 0
          %405 = vmatpush2.bf16.xpose.msra.mxu0 0
          %406 = vmatprep.subr.bf16.mxu0 0
          %407 = vmatpush2.bf16.xpose.msra.mxu0 0
          %408 = vmatprep.subr.bf16.mxu0 0
          %409 = vmatpush2.bf16.xpose.msra.mxu0 0
          %410 = vmatprep.subr.bf16.mxu0 0
          %411 = vmatpush2.bf16.xpose.msra.mxu0 0
          %412 = vmatprep.mubr.bf16.mxu0 0
          %413 = vmatmul.mubr.bf16.gmra.mxu0 %v375
          %v414 = vpop.f32.mrf.mxu0
          %v415 = vadd.f32 0.0, %v414
          %v416 = vpop.f32.mrf.mxu0
          %v417 = vpop.f32.mrf.mxu0
          %v418 = vpop.f32.mrf.mxu0
          %419 = vdwg.mxu0
          %v420 = vld [vmem:[#allocation3] sm:$0xff]
          %v421 = vsel %vm373, %v415, -inf
          %422 = vmax.xlane.f32.xlu0 %v421
          %v423 = vpop.xlane.xlu0 %422
          %v424 = vmax.f32 %v420, %v423
          %v425 = vsub.f32 %v420, %v424
          %v426 = vmul.f32 %v425, 1.442695
          %v427 = vpow.pop %v426
          %429 = vset.pattern.permute.xlu0 0
          %430 = vperm.xlu0 %429, %v424
          %v431 = vpop.permute.xlu0 %430
          %v433 = vsub.f32 %v415, %v431
          %v434 = vmul.f32 %v433, 1.442695
          %v435 = vpow.pop %v434
          %v436 = vld [vmem:[#allocation4] sm:$0xff]
          %v437 = vmul.f32 %v427, %v436
          %v438 = vsel %vm373, %v435, 0.0
          %439 = vadd.xlane.f32.xlu0 %v438
          %v440 = vpop.xlane.xlu0 %439
          %v441 = vadd.f32 %v437, %v440
          %vm442 = vcmask 7168
          %443 = vst.msk [vmem:[#allocation4] sm:$0xff] %vm442, %v441
          %v444 = vld [vmem:[#allocation5] sm:$0xff]
          %446 = vset.pattern.permute.xlu0 0
          %447 = vperm.xlu0 %446, %v427
          %v448 = vpop.permute.xlu0 %447
          %v450 = vmul.f32 %v448, %v444
          %v451 = vpack.c.bf16 %v435, %v435
          %453 = vrot.lane.b32.xlu0 %v371, 120
          %v454 = vpop.permute.xlu0 %453
          %v456 = vsel %vm373, %v451, 0
          %vm458 = vcmask 1043456
          %v460 = vsel %vm458, %v454, 0
          %462 = vmatprep.subr.bf16.mxu0 0
          %463 = vmatpush1.bf16.msra.mxu0 0
          %464 = vmatprep.subr.bf16.mxu0 0
          %465 = vmatpush1.bf16.msra.mxu0 0
          %466 = vmatprep.subr.bf16.mxu0 0
          %467 = vmatpush1.bf16.msra.mxu0 0
          %468 = vmatprep.subr.bf16.mxu0 0
          %469 = vmatpush1.bf16.msra.mxu0 0
          %470 = vmatprep.subr.bf16.mxu0 0
          %471 = vmatpush1.bf16.msra.mxu0 0
          %472 = vmatprep.subr.bf16.mxu0 0
          %473 = vmatpush1.bf16.msra.mxu0 0
          %474 = vmatprep.subr.bf16.mxu0 0
          %475 = vmatpush1.bf16.msra.mxu0 0
          %476 = vmatprep.subr.bf16.mxu0 0
          %477 = vmatpush1.bf16.msra.mxu0 %v460
          %478 = vmatprep.subr.bf16.mxu0 0
          %479 = vmatpush2.bf16.msra.mxu0 0
          %480 = vmatprep.subr.bf16.mxu0 0
          %481 = vmatpush2.bf16.msra.mxu0 0
          %482 = vmatprep.subr.bf16.mxu0 0
          %483 = vmatpush2.bf16.msra.mxu0 0
          %484 = vmatprep.subr.bf16.mxu0 0
          %485 = vmatpush2.bf16.msra.mxu0 0
          %486 = vmatprep.subr.bf16.mxu0 0
          %487 = vmatpush2.bf16.msra.mxu0 0
          %488 = vmatprep.subr.bf16.mxu0 0
          %489 = vmatpush2.bf16.msra.mxu0 0
          %490 = vmatprep.subr.bf16.mxu0 0
          %491 = vmatpush2.bf16.msra.mxu0 0
          %492 = vmatprep.subr.bf16.mxu0 0
          %493 = vmatpush2.bf16.msra.mxu0 0
          %494 = vmatprep.mubr.bf16.mxu0 0
          %495 = vmatmul.mubr.bf16.gmra.mxu0 %v456
          %v496 = vpop.f32.mrf.mxu0
          %v497 = vadd.f32 0.0, %v496
          %v498 = vpop.f32.mrf.mxu0
          %v499 = vpop.f32.mrf.mxu0
          %v500 = vpop.f32.mrf.mxu0
          %501 = vdwg.mxu0
          %v502 = vadd.f32 %v450, %v497
          %503 = vst.msk [vmem:[#allocation5] sm:$0xff] %vm373, %v502
          %504 = vst.msk [vmem:[#allocation3] sm:$0xff] %vm442, %v424
        $region40: #{head_forward.1} parent=31 // pred_fallthru
          _
        %p505 = scmp.gt.s32.totalorder %s304, %s227
        %p506 = scmp.le.s32.totalorder %s228, %s229
        %p507 = pnand %p505, %p506
        %p508 = pneg %p507
        // Predicated region
        $region41: #{head_forward.1} parent=31 // pred_check
          _
        $region42: #{head_forward.1} parent=31 // pred_check_branch
          %510 = sbr.rel (%p507) target = $region44
        $region43: #{head_forward.1} parent=31 // pred_region
          %v511 = vld [vmem:[%s225] sm:$0xff]
          %v512 = vpack.c.bf16 %v511, %v511
          %v517 = vunpack.c.l.b16 %v230
          %v518 = vunpack.c.l.b16 %v231
          %v519 = vunpack.c.l.b16 %v232
          %v520 = vunpack.c.l.b16 %v233
          %v521 = vpack.c.b16 %v518, %v517
          %v522 = vpack.c.b16 %v520, %v519
          %523 = vrot.lane.b32.xlu0 %v521, 120
          %v524 = vpop.permute.xlu0 %523
          %525 = vrot.lane.b32.xlu0 %v522, 120
          %v526 = vpop.permute.xlu0 %525
          %vm529 = vcmask 261120
          %v531 = vsel %vm529, %v512, 0
          %533 = vmatprep.subr.bf16.mxu0 0
          %534 = vmatpush1.bf16.msra.mxu0 0
          %535 = vmatprep.subr.bf16.mxu0 0
          %536 = vmatpush1.bf16.msra.mxu0 0
          %537 = vmatprep.subr.bf16.mxu0 0
          %538 = vmatpush1.bf16.msra.mxu0 0
          %539 = vmatprep.subr.bf16.mxu0 0
          %540 = vmatpush1.bf16.msra.mxu0 0
          %541 = vmatprep.subr.bf16.mxu0 0
          %542 = vmatpush1.bf16.msra.mxu0 0
          %543 = vmatprep.subr.bf16.mxu0 0
          %544 = vmatpush1.bf16.msra.mxu0 0
          %545 = vmatprep.subr.bf16.mxu0 0
          %546 = vmatpush1.bf16.msra.mxu0 %v526
          %547 = vmatprep.subr.bf16.mxu0 0
          %548 = vmatpush1.bf16.msra.mxu0 %v524
          %549 = vmatprep.subr.bf16.mxu0 0
          %550 = vmatpush2.bf16.msra.mxu0 0
          %551 = vmatprep.subr.bf16.mxu0 0
          %552 = vmatpush2.bf16.msra.mxu0 0
          %553 = vmatprep.subr.bf16.mxu0 0
          %554 = vmatpush2.bf16.msra.mxu0 0
          %555 = vmatprep.subr.bf16.mxu0 0
          %556 = vmatpush2.bf16.msra.mxu0 0
          %557 = vmatprep.subr.bf16.mxu0 0
          %558 = vmatpush2.bf16.msra.mxu0 0
          %559 = vmatprep.subr.bf16.mxu0 0
          %560 = vmatpush2.bf16.msra.mxu0 0
          %561 = vmatprep.subr.bf16.mxu0 0
          %562 = vmatpush2.bf16.msra.mxu0 0
          %563 = vmatprep.subr.bf16.mxu0 0
          %564 = vmatpush2.bf16.msra.mxu0 0
          %565 = vmatprep.mubr.bf16.mxu0 0
          %566 = vmatmul.mubr.bf16.gmra.mxu0 %v531
          %v567 = vpop.f32.mrf.mxu0
          %v568 = vadd.f32 0.0, %v567
          %v569 = vpop.f32.mrf.mxu0
          %v570 = vpop.f32.mrf.mxu0
          %v571 = vpop.f32.mrf.mxu0
          %572 = vdwg.mxu0
          %v573 = vpack.c.bf16 %v568, %v568
          %v574 = vld [vmem:[#allocation2] sm:$0xf]
          %vm575 = vcmask 64512
          %v577 = vsel %vm575, %v574, 0
          %v580 = vsel %vm575, %v573, 0
          %582 = vmatprep.subr.bf16.mxu0 0
          %583 = vmatpush1.bf16.xpose.msra.mxu0 0
          %584 = vmatprep.subr.bf16.mxu0 0
          %585 = vmatpush1.bf16.xpose.msra.mxu0 0
          %586 = vmatprep.subr.bf16.mxu0 0
          %587 = vmatpush1.bf16.xpose.msra.mxu0 0
          %588 = vmatprep.subr.bf16.mxu0 0
          %589 = vmatpush1.bf16.xpose.msra.mxu0 0
          %590 = vmatprep.subr.bf16.mxu0 0
          %591 = vmatpush1.bf16.xpose.msra.mxu0 0
          %592 = vmatprep.subr.bf16.mxu0 0
          %593 = vmatpush1.bf16.xpose.msra.mxu0 0
          %594 = vmatprep.subr.bf16.mxu0 0
          %595 = vmatpush1.bf16.xpose.msra.mxu0 0
          %596 = vmatprep.subr.bf16.mxu0 0
          %597 = vmatpush1.bf16.xpose.msra.mxu0 %v580
          %598 = vmatprep.subr.bf16.mxu0 0
          %599 = vmatpush2.bf16.xpose.msra.mxu0 0
          %600 = vmatprep.subr.bf16.mxu0 0
          %601 = vmatpush2.bf16.xpose.msra.mxu0 0
          %602 = vmatprep.subr.bf16.mxu0 0
          %603 = vmatpush2.bf16.xpose.msra.mxu0 0
          %604 = vmatprep.subr.bf16.mxu0 0
          %605 = vmatpush2.bf16.xpose.msra.mxu0 0
          %606 = vmatprep.subr.bf16.mxu0 0
          %607 = vmatpush2.bf16.xpose.msra.mxu0 0
          %608 = vmatprep.subr.bf16.mxu0 0
          %609 = vmatpush2.bf16.xpose.msra.mxu0 0
          %610 = vmatprep.subr.bf16.mxu0 0
          %611 = vmatpush2.bf16.xpose.msra.mxu0 0
          %612 = vmatprep.subr.bf16.mxu0 0
          %613 = vmatpush2.bf16.xpose.msra.mxu0 0
          %614 = vmatprep.mubr.bf16.mxu0 0
          %615 = vmatmul.mubr.bf16.gmra.mxu0 %v577
          %v616 = vpop.f32.mrf.mxu0
          %v617 = vadd.f32 0.0, %v616
          %v618 = vpop.f32.mrf.mxu0
          %v619 = vpop.f32.mrf.mxu0
          %v620 = vpop.f32.mrf.mxu0
          %621 = vdwg.mxu0
          %v622 = vlaneseq
          %v623 = vshrl.u32 %v622, 7
          %v624 = vstv %s227
          %v625 = vadd.s32 %v624, %v623
          %v626 = vlaneseq
          %v627 = vand.u32 %v626, 127
          %v628 = vstv %s228
          %v629 = vadd.s32 %v628, %v627
          %vm630 = vcmp.le.s32.totalorder %v629, %v625
          %v631 = vsel %vm630, %v617, -1e+30
          %v632 = vld [vmem:[#allocation3] sm:$0xff]
          %v633 = vsel %vm575, %v631, -inf
          %634 = vmax.xlane.f32.xlu0 %v633
          %v635 = vpop.xlane.xlu0 %634
          %v636 = vmax.f32 %v632, %v635
          %v637 = vsub.f32 %v632, %v636
          %v638 = vmul.f32 %v637, 1.442695
          %v639 = vpow.pop %v638
          %641 = vset.pattern.permute.xlu0 0
          %642 = vperm.xlu0 %641, %v636
          %v643 = vpop.permute.xlu0 %642
          %v645 = vsub.f32 %v631, %v643
          %v646 = vmul.f32 %v645, 1.442695
          %v647 = vpow.pop %v646
          %v648 = vld [vmem:[#allocation4] sm:$0xff]
          %v649 = vmul.f32 %v639, %v648
          %v650 = vsel %vm575, %v647, 0.0
          %651 = vadd.xlane.f32.xlu0 %v650
          %v652 = vpop.xlane.xlu0 %651
          %v653 = vadd.f32 %v649, %v652
          %vm654 = vcmask 7168
          %655 = vst.msk [vmem:[#allocation4] sm:$0xff] %vm654, %v653
          %v656 = vld [vmem:[#allocation5] sm:$0xff]
          %658 = vset.pattern.permute.xlu0 0
          %659 = vperm.xlu0 %658, %v639
          %v660 = vpop.permute.xlu0 %659
          %v662 = vmul.f32 %v660, %v656
          %v663 = vpack.c.bf16 %v647, %v647
          %665 = vrot.lane.b32.xlu0 %v573, 120
          %v666 = vpop.permute.xlu0 %665
          %v668 = vsel %vm575, %v663, 0
          %vm670 = vcmask 1043456
          %v672 = vsel %vm670, %v666, 0
          %674 = vmatprep.subr.bf16.mxu0 0
          %675 = vmatpush1.bf16.msra.mxu0 0
          %676 = vmatprep.subr.bf16.mxu0 0
          %677 = vmatpush1.bf16.msra.mxu0 0
          %678 = vmatprep.subr.bf16.mxu0 0
          %679 = vmatpush1.bf16.msra.mxu0 0
          %680 = vmatprep.subr.bf16.mxu0 0
          %681 = vmatpush1.bf16.msra.mxu0 0
          %682 = vmatprep.subr.bf16.mxu0 0
          %683 = vmatpush1.bf16.msra.mxu0 0
          %684 = vmatprep.subr.bf16.mxu0 0
          %685 = vmatpush1.bf16.msra.mxu0 0
          %686 = vmatprep.subr.bf16.mxu0 0
          %687 = vmatpush1.bf16.msra.mxu0 0
          %688 = vmatprep.subr.bf16.mxu0 0
          %689 = vmatpush1.bf16.msra.mxu0 %v672
          %690 = vmatprep.subr.bf16.mxu0 0
          %691 = vmatpush2.bf16.msra.mxu0 0
          %692 = vmatprep.subr.bf16.mxu0 0
          %693 = vmatpush2.bf16.msra.mxu0 0
          %694 = vmatprep.subr.bf16.mxu0 0
          %695 = vmatpush2.bf16.msra.mxu0 0
          %696 = vmatprep.subr.bf16.mxu0 0
          %697 = vmatpush2.bf16.msra.mxu0 0
          %698 = vmatprep.subr.bf16.mxu0 0
          %699 = vmatpush2.bf16.msra.mxu0 0
          %700 = vmatprep.subr.bf16.mxu0 0
          %701 = vmatpush2.bf16.msra.mxu0 0
          %702 = vmatprep.subr.bf16.mxu0 0
          %703 = vmatpush2.bf16.msra.mxu0 0
          %704 = vmatprep.subr.bf16.mxu0 0
          %705 = vmatpush2.bf16.msra.mxu0 0
          %706 = vmatprep.mubr.bf16.mxu0 0
          %707 = vmatmul.mubr.bf16.gmra.mxu0 %v668
          %v708 = vpop.f32.mrf.mxu0
          %v709 = vadd.f32 0.0, %v708
          %v710 = vpop.f32.mrf.mxu0
          %v711 = vpop.f32.mrf.mxu0
          %v712 = vpop.f32.mrf.mxu0
          %713 = vdwg.mxu0
          %v714 = vadd.f32 %v662, %v709
          %715 = vst.msk [vmem:[#allocation5] sm:$0xff] %vm575, %v714
          %716 = vst.msk [vmem:[#allocation3] sm:$0xff] %vm654, %v636
        $region44: #{head_forward.1} parent=31 // pred_fallthru
          _
        // Predicated region
        $region45: #{head_forward.1} parent=31 // pred_check
          %p717 = pneg %p234
        $region46: #{head_forward.1} parent=31 // pred_check_branch
          %719 = sbr.rel (%p717) target = $region48
        $region47: #{head_forward.1} parent=31 // pred_region
          %v720 = vld [vmem:[#allocation4] sm:$0xff]
          %v721 = vrcp.pop %v720
          %v722 = vld [vmem:[#allocation5] sm:$0xff]
          %724 = vset.pattern.permute.xlu0 0
          %725 = vperm.xlu0 %724, %v721
          %v726 = vpop.permute.xlu0 %725
          %v728 = vmul.f32 %v722, %v726
          %vm729 = vcmask 64512
          %730 = vst.msk [vmem:[%s211] sm:$0xff] %vm729, %v728
        $region48: #{head_forward.1} parent=31 // pred_fallthru
          _
        %s731 = sand.u32 %s123, 1
        %s732 = scalar_lea.sflag [#allocation7], %s731
        %s733 = sand.u32 %s123, 1
        %s734 = smul.addr %s733, 8
        %s735 = scalar_lea.vmem [#allocation6], %s734
        // Predicated region
        $region49: #{head_forward.1} parent=31 // pred_check
          %p736 = pneg %p133
        $region50: #{head_forward.1} parent=31 // pred_check_branch
          %738 = sbr.rel (%p736) target = $region52
        $region51: #{head_forward.1} parent=31 // pred_region
          %s740 = ssub.s32 128, 128
          %741 = vsyncadd %s732, %s740
          %s742 = sadd.s32 %s23, %s22
          %s743 = smul.addr %s742, 128
          %s744 = scalar_lea.hbm %s3, %s743
          %s746 = sshll.u32 %s735, 4
          %s747 = int_to_ptr.vmem [resolvable:$true] %s746
          %749 = dma.vmem_to_hbm [thread:$0]  %s747, 128, %s744, %s732
        $region52: #{head_forward.1} parent=31 // pred_fallthru
          _
      $region32: #{head_forward.1} parent=5 // pred_fallthru
        _
      %p750 = scmp.le.s32.totalorder 2, %s12
      // Predicated region
      $region53: #{head_forward.1} parent=5 // pred_check
        %p751 = pneg %p750
      $region54: #{head_forward.1} parent=5 // pred_check_branch
        %753 = sbr.rel (%p751) target = $region56
      $region55: #{head_forward.1} parent=5 // pred_region
        %s754 = ssub.s32 %s12, 2
        // Predicated region
        $region57: #{head_forward.1} parent=55 // pred_check
          %p755 = pneg %p139
        $region58: #{head_forward.1} parent=55 // pred_check_branch
          %757 = sbr.rel (%p755) target = $region60
        $region59: #{head_forward.1} parent=55 // pred_region
          %s758 = sand.u32 %s124, 1
          %s759 = scalar_lea.sflag [#allocation7], %s758
          %s760 = sand.u32 %s124, 1
          %s761 = smul.addr %s760, 8
          %s762 = scalar_lea.vmem [#allocation6], %s761
          %763 = dma.done %s759, 128
        $region60: #{head_forward.1} parent=55 // pred_fallthru
          _
      $region56: #{head_forward.1} parent=5 // pred_fallthru
        _
    $region6: #{head_forward.1} parent=1 // loop_footer
      %s16 = sadd.s32 1, %s12
    $region7: #{head_forward.1} parent=1 // loop_footer_branch
      %11 = sbr.rel target = $region3
    $region8: #{head_forward.1} parent=1 // loop_exit
      _
    %764 = vsyncpa [#allocation7], 1
    %s765 = scalar_lea.sflag [#allocation7], 1
    %766 = vsyncpa %s765, 1

</llo_original>
